<compile_context>
chip_gen: v6e
topology: v6e:2x2x1
jax: 0.10.0
libtpu: 0.0.40
codegen_flags: <defaults>
</compile_context>

<pallas_src>
import jax
import jax.numpy as jnp
from jax import lax
from jax.experimental import pallas as pl
from jax.experimental.pallas import tpu as pltpu


def _round_up(x, m):
    return ((x + m - 1) // m) * m


def _snn_kernel(x1_ref, x2_ref, w1_ref, b1_ref, w2_ref, b2_ref, o_ref, h_acc):
    """Grid = (batch_blocks, k_blocks).

    x1_ref, x2_ref : (TB, TK)       bf16 flattened image tiles (K-sliced)
    w1_ref         : (TK, HID_P)    bf16 first linear weight tile
    b1_ref         : (1, HID_P)     f32 first linear bias
    w2_ref         : (HID_P, EMB_P) bf16 second linear weight
    b2_ref         : (1, EMB_P)     f32 second linear bias
    o_ref          : (TB, 128)      f32 similarity score slab (lane-dense)
    h_acc          : (2*TB, HID_P)  f32 accumulator for x @ w1
    """
    k = pl.program_id(1)

    @pl.when(k == 0)
    def _init():
        h_acc[...] = jnp.zeros_like(h_acc)

    # One MXU pass for both images of the pair: (2*TB, TK) @ (TK, HID_P).
    x = jnp.concatenate([x1_ref[...], x2_ref[...]], axis=0)
    h_acc[...] += jnp.dot(x, w1_ref[...], preferred_element_type=jnp.float32)

    @pl.when(k == pl.num_programs(1) - 1)
    def _finalize():
        tb = o_ref.shape[0]
        # bias + ReLU in f32, then second (tiny) matmul in bf16 -> f32.
        h = jnp.maximum(h_acc[...] + b1_ref[...], 0.0)
        e = jnp.dot(h.astype(jnp.bfloat16), w2_ref[...],
                    preferred_element_type=jnp.float32) + b2_ref[...]
        e1 = e[:tb]
        e2 = e[tb:]

        # Cosine similarity along features (PyTorch dim=1, per-norm eps=1e-8).
        dot = jnp.sum(e1 * e2, axis=1, keepdims=True)
        n1sq = jnp.sum(e1 * e1, axis=1, keepdims=True)
        n2sq = jnp.sum(e2 * e2, axis=1, keepdims=True)
        eps = jnp.float32(1e-8)
        denom_sq = jnp.maximum(n1sq, eps * eps) * jnp.maximum(n2sq, eps * eps)
        cos = dot * lax.rsqrt(denom_sq)            # EUP rsqrt, no divide
        score = (cos + 1.0) * 0.5                  # (TB, 1)

        # Lane-dense store: broadcast across 128 lanes (unmasked vst).
        o_ref[...] = jnp.broadcast_to(score, o_ref.shape)


def snn_forward(imgs1, imgs2, w1, b1, w2, b2, *, tk_max=512, tb_max=128):
    """imgs1, imgs2: (B, C, H, W) float32 NCHW. Returns (B,) similarity."""
    B = imgs1.shape[0]
    IN = imgs1.shape[1] * imgs1.shape[2] * imgs1.shape[3]
    HID = w1.shape[1]
    EMB = w2.shape[1]

    # Padded / tiled sizes (zeros are inert for dot products and norms).
    BP = _round_up(B, 16)
    TB = min(BP, tb_max)
    BP = _round_up(BP, TB)

    IN_P = _round_up(IN, 128)
    TK = min(IN_P, tk_max)
    IN_P = _round_up(IN_P, TK)

    HID_P = _round_up(HID, 128)
    EMB_P = _round_up(EMB, 128)

    # Flatten row-major (== torch.flatten) and pad; matmul operands in bf16.
    x1 = imgs1.reshape(B, IN).astype(jnp.bfloat16)
    x2 = imgs2.reshape(B, IN).astype(jnp.bfloat16)
    x1p = jnp.zeros((BP, IN_P), jnp.bfloat16).at[:B, :IN].set(x1)
    x2p = jnp.zeros((BP, IN_P), jnp.bfloat16).at[:B, :IN].set(x2)
    w1p = jnp.zeros((IN_P, HID_P), jnp.bfloat16).at[:IN, :HID].set(
        w1.astype(jnp.bfloat16))
    b1p = jnp.zeros((1, HID_P), jnp.float32).at[0, :HID].set(
        b1.astype(jnp.float32))
    w2p = jnp.zeros((HID_P, EMB_P), jnp.bfloat16).at[:HID, :EMB].set(
        w2.astype(jnp.bfloat16))
    b2p = jnp.zeros((1, EMB_P), jnp.float32).at[0, :EMB].set(
        b2.astype(jnp.float32))

    grid = (BP // TB, IN_P // TK)   # (batch parallel, K reduction last)

    out = pl.pallas_call(
        _snn_kernel,
        out_shape=jax.ShapeDtypeStruct((BP, 128), jnp.float32),
        grid_spec=pltpu.PrefetchScalarGridSpec(
            num_scalar_prefetch=0,
            grid=grid,
            in_specs=[
                pl.BlockSpec((TB, TK), lambda b, k: (b, k)),        # x1
                pl.BlockSpec((TB, TK), lambda b, k: (b, k)),        # x2
                pl.BlockSpec((TK, HID_P), lambda b, k: (k, 0)),     # w1
                pl.BlockSpec((1, HID_P), lambda b, k: (0, 0)),      # b1
                pl.BlockSpec((HID_P, EMB_P), lambda b, k: (0, 0)),  # w2
                pl.BlockSpec((1, EMB_P), lambda b, k: (0, 0)),      # b2
            ],
            out_specs=pl.BlockSpec((TB, 128), lambda b, k: (b, 0)),
            scratch_shapes=[pltpu.VMEM((2 * TB, HID_P), jnp.float32)],
        ),
        compiler_params=pltpu.CompilerParams(
            dimension_semantics=("parallel", "arbitrary"),
            vmem_limit_bytes=32 * 1024 * 1024,   # safe on v5e/v6e/v7x
        ),
    )(x1p, x2p, w1p, b1p, w2p, b2p)

    return out[:B, 0]


def _reference(imgs1, imgs2, w1, b1, w2, b2):
    """Pure-JAX reference (same bf16 rounding of matmul operands)."""
    def embed(x):
        x = x.reshape(x.shape[0], -1)
        xb = x.astype(jnp.bfloat16).astype(jnp.float32)
        w1b = w1.astype(jnp.bfloat16).astype(jnp.float32)
        h = jnp.maximum(xb @ w1b + b1, 0.0)
        hb = h.astype(jnp.bfloat16).astype(jnp.float32)
        w2b = w2.astype(jnp.bfloat16).astype(jnp.float32)
        return hb @ w2b + b2

    e1, e2 = embed(imgs1), embed(imgs2)
    dot = jnp.sum(e1 * e2, axis=1)
    n1 = jnp.maximum(jnp.linalg.norm(e1, axis=1), 1e-8)
    n2 = jnp.maximum(jnp.linalg.norm(e2, axis=1), 1e-8)
    return (dot / (n1 * n2) + 1.0) / 2.0


if __name__ == "__main__":
    B, C, H, W = 2, 4, 16, 16
    HID, EMB = 32, 32
    IN = C * H * W

    key = jax.random.PRNGKey(0)
    k1, k2, k3, k4, k5, k6 = jax.random.split(key, 6)

    imgs1 = jax.random.normal(k1, (B, C, H, W), dtype=jnp.float32)
    imgs2 = jax.random.normal(k2, (B, C, H, W), dtype=jnp.float32)

    # Deterministic backbone parameters (Kaiming-ish scaling).
    w1 = jax.random.normal(k3, (IN, HID), dtype=jnp.float32) * (2.0 / IN) ** 0.5
    b1 = jax.random.normal(k4, (HID,), dtype=jnp.float32) * 0.01
    w2 = jax.random.normal(k5, (HID, EMB), dtype=jnp.float32) * (2.0 / HID) ** 0.5
    b2 = jax.random.normal(k6, (EMB,), dtype=jnp.float32) * 0.01

    out = snn_forward(imgs1, imgs2, w1, b1, w2, b2)
    jax.block_until_ready(out)

    ref = _reference(imgs1, imgs2, w1, b1, w2, b2)
    assert out.shape == (B,)
    assert jnp.allclose(out, ref, atol=2e-3, rtol=2e-3), (out, ref)
    assert bool(jnp.all((out >= -1e-5) & (out <= 1.0 + 1e-5)))

    print("KERNEL_OK")
</pallas_src>

<mosaic_0001>
module attributes {stable_mosaic.version = 11 : i64} {
  func.func @_snn_kernel(%arg0: i32, %arg1: i32, %arg2: memref<16x512xbf16, #tpu.memory_space<vmem>>, %arg3: memref<16x512xbf16, #tpu.memory_space<vmem>>, %arg4: memref<512x128xbf16, #tpu.memory_space<vmem>>, %arg5: memref<1x128xf32, #tpu.memory_space<vmem>>, %arg6: memref<128x128xbf16, #tpu.memory_space<vmem>>, %arg7: memref<1x128xf32, #tpu.memory_space<vmem>>, %arg8: memref<16x128xf32, #tpu.memory_space<vmem>>, %arg9: memref<32x128xf32, #tpu.memory_space<vmem>>) attributes {dimension_semantics = [#tpu.dimension_semantics<parallel>, #tpu.dimension_semantics<arbitrary>], iteration_bounds = array<i64: 1, 2>, scalar_prefetch = 0 : i64, scratch_operands = 1 : i64, tpu.core_type = #tpu.core_type<tc>, window_params = [{transform_indices = @transform_0, window_bounds = array<i64: 16, 512>}, {transform_indices = @transform_1, window_bounds = array<i64: 16, 512>}, {transform_indices = @transform_2, window_bounds = array<i64: 512, 128>}, {pipeline_mode = #tpu.pipeline_mode<synchronous>, transform_indices = @transform_3, window_bounds = array<i64: 1, 128>}, {pipeline_mode = #tpu.pipeline_mode<synchronous>, transform_indices = @transform_4, window_bounds = array<i64: 128, 128>}, {pipeline_mode = #tpu.pipeline_mode<synchronous>, transform_indices = @transform_5, window_bounds = array<i64: 1, 128>}, {transform_indices = @transform_6, window_bounds = array<i64: 16, 128>}]} {
    %c0_i32 = arith.constant 0 : i32
    %0 = arith.cmpi eq, %arg1, %c0_i32 : i32
    %1 = arith.extui %0 : i1 to i32
    %c0_i32_0 = arith.constant 0 : i32
    %2 = arith.cmpi ne, %1, %c0_i32_0 : i32
    scf.if %2 {
      %cst_11 = arith.constant 0.000000e+00 : f32
      %14 = vector.broadcast %cst_11 : f32 to vector<32x128xf32>
      %c0_12 = arith.constant 0 : index
      %c0_13 = arith.constant 0 : index
      %15 = vector.load %arg9[%c0_12, %c0_13] : memref<32x128xf32, #tpu.memory_space<vmem>>, vector<32x128xf32>
      tpu.vector_store %arg9[%c0_12, %c0_13], %14 {strides = array<i32>} : memref<32x128xf32, #tpu.memory_space<vmem>>, vector<32x128xf32>,
    } else {
    }
    %c0 = arith.constant 0 : index
    %c0_1 = arith.constant 0 : index
    %3 = vector.load %arg2[%c0, %c0_1] : memref<16x512xbf16, #tpu.memory_space<vmem>>, vector<16x512xbf16>
    %c0_2 = arith.constant 0 : index
    %c0_3 = arith.constant 0 : index
    %4 = vector.load %arg3[%c0_2, %c0_3] : memref<16x512xbf16, #tpu.memory_space<vmem>>, vector<16x512xbf16>
    %5 = tpu.concatenate %3, %4 in 0 : vector<16x512xbf16>, vector<16x512xbf16> -> vector<32x512xbf16>
    %c0_4 = arith.constant 0 : index
    %c0_5 = arith.constant 0 : index
    %6 = vector.load %arg9[%c0_4, %c0_5] : memref<32x128xf32, #tpu.memory_space<vmem>>, vector<32x128xf32>
    %c0_6 = arith.constant 0 : index
    %c0_7 = arith.constant 0 : index
    %7 = vector.load %arg4[%c0_6, %c0_7] : memref<512x128xbf16, #tpu.memory_space<vmem>>, vector<512x128xbf16>
    %cst = arith.constant dense<0.000000e+00> : vector<32x128xf32>
    %8 = tpu.matmul %5, %7, %cst {dimension_numbers = #tpu.dot_dimension_numbers<[1], [0], [0], [1], [0, 0, 1, 1], [], []>} : vector<32x512xbf16>, vector<512x128xbf16>, vector<32x128xf32> -> vector<32x128xf32>
    %9 = arith.addf %6, %8 : vector<32x128xf32>
    %c0_8 = arith.constant 0 : index
    %c0_9 = arith.constant 0 : index
    %10 = vector.load %arg9[%c0_8, %c0_9] : memref<32x128xf32, #tpu.memory_space<vmem>>, vector<32x128xf32>
    tpu.vector_store %arg9[%c0_8, %c0_9], %9 {strides = array<i32>} : memref<32x128xf32, #tpu.memory_space<vmem>>, vector<32x128xf32>,
    %c1_i32 = arith.constant 1 : i32
    %11 = arith.cmpi eq, %arg1, %c1_i32 : i32
    %12 = arith.extui %11 : i1 to i32
    %c0_i32_10 = arith.constant 0 : i32
    %13 = arith.cmpi ne, %12, %c0_i32_10 : i32
    scf.if %13 {
      %c0_11 = arith.constant 0 : index
      %c0_12 = arith.constant 0 : index
      %14 = vector.load %arg9[%c0_11, %c0_12] : memref<32x128xf32, #tpu.memory_space<vmem>>, vector<32x128xf32>
      %c0_13 = arith.constant 0 : index
      %c0_14 = arith.constant 0 : index
      %15 = vector.load %arg5[%c0_13, %c0_14] : memref<1x128xf32, #tpu.memory_space<vmem>>, vector<1x128xf32>
      %16 = vector.broadcast %15 : vector<1x128xf32> to vector<32x128xf32>
      %17 = arith.addf %14, %16 : vector<32x128xf32>
      %cst_15 = arith.constant 0.000000e+00 : f32
      %18 = vector.broadcast %cst_15 : f32 to vector<32x128xf32>
      %19 = arith.maximumf %17, %18 : vector<32x128xf32>
      %20 = arith.truncf %19 : vector<32x128xf32> to vector<32x128xbf16>
      %c0_16 = arith.constant 0 : index
      %c0_17 = arith.constant 0 : index
      %21 = vector.load %arg6[%c0_16, %c0_17] : memref<128x128xbf16, #tpu.memory_space<vmem>>, vector<128x128xbf16>
      %cst_18 = arith.constant dense<0.000000e+00> : vector<32x128xf32>
      %22 = tpu.matmul %20, %21, %cst_18 {dimension_numbers = #tpu.dot_dimension_numbers<[1], [0], [0], [1], [0, 0, 1, 1], [], []>} : vector<32x128xbf16>, vector<128x128xbf16>, vector<32x128xf32> -> vector<32x128xf32>
      %c0_19 = arith.constant 0 : index
      %c0_20 = arith.constant 0 : index
      %23 = vector.load %arg7[%c0_19, %c0_20] : memref<1x128xf32, #tpu.memory_space<vmem>>, vector<1x128xf32>
      %24 = vector.broadcast %23 : vector<1x128xf32> to vector<32x128xf32>
      %25 = arith.addf %22, %24 : vector<32x128xf32>
      %26 = vector.extract_strided_slice %25 {offsets = [0, 0], sizes = [16, 128], strides = [1, 1]} : vector<32x128xf32> to vector<16x128xf32>
      %27 = vector.extract_strided_slice %25 {offsets = [16, 0], sizes = [16, 128], strides = [1, 1]} : vector<32x128xf32> to vector<16x128xf32>
      %28 = arith.mulf %26, %27 : vector<16x128xf32>
      %cst_21 = arith.constant dense<0.000000e+00> : vector<16xf32>
      %29 = vector.multi_reduction <add>, %28, %cst_21 [1] : vector<16x128xf32> to vector<16xf32>
      %30 = vector.shape_cast %29 : vector<16xf32> to vector<16x1xf32>
      %31 = arith.mulf %26, %26 : vector<16x128xf32>
      %cst_22 = arith.constant dense<0.000000e+00> : vector<16xf32>
      %32 = vector.multi_reduction <add>, %31, %cst_22 [1] : vector<16x128xf32> to vector<16xf32>
      %33 = vector.shape_cast %32 : vector<16xf32> to vector<16x1xf32>
      %34 = arith.mulf %27, %27 : vector<16x128xf32>
      %cst_23 = arith.constant dense<0.000000e+00> : vector<16xf32>
      %35 = vector.multi_reduction <add>, %34, %cst_23 [1] : vector<16x128xf32> to vector<16xf32>
      %36 = vector.shape_cast %35 : vector<16xf32> to vector<16x1xf32>
      %cst_24 = arith.constant 9.99999993E-9 : f32
      %cst_25 = arith.constant 9.99999993E-9 : f32
      %37 = arith.mulf %cst_24, %cst_25 : f32
      %38 = vector.broadcast %37 : f32 to vector<16x1xf32>
      %39 = arith.maximumf %33, %38 : vector<16x1xf32>
      %cst_26 = arith.constant 9.99999993E-9 : f32
      %cst_27 = arith.constant 9.99999993E-9 : f32
      %40 = arith.mulf %cst_26, %cst_27 : f32
      %41 = vector.broadcast %40 : f32 to vector<16x1xf32>
      %42 = arith.maximumf %36, %41 : vector<16x1xf32>
      %43 = arith.mulf %39, %42 : vector<16x1xf32>
      %44 = math.rsqrt %43 : vector<16x1xf32>
      %45 = arith.mulf %30, %44 : vector<16x1xf32>
      %cst_28 = arith.constant 1.000000e+00 : f32
      %46 = vector.broadcast %cst_28 : f32 to vector<16x1xf32>
      %47 = arith.addf %45, %46 : vector<16x1xf32>
      %cst_29 = arith.constant 5.000000e-01 : f32
      %48 = vector.broadcast %cst_29 : f32 to vector<16x1xf32>
      %49 = arith.mulf %47, %48 : vector<16x1xf32>
      %50 = vector.shape_cast %49 : vector<16x1xf32> to vector<16x1xf32>
      %51 = vector.broadcast %50 : vector<16x1xf32> to vector<16x128xf32>
      %c0_30 = arith.constant 0 : index
      %c0_31 = arith.constant 0 : index
      %52 = vector.load %arg8[%c0_30, %c0_31] : memref<16x128xf32, #tpu.memory_space<vmem>>, vector<16x128xf32>
      tpu.vector_store %arg8[%c0_30, %c0_31], %51 {strides = array<i32>} : memref<16x128xf32, #tpu.memory_space<vmem>>, vector<16x128xf32>,
    } else {
    }
    return
  }
  func.func @transform_0(%arg0: i32, %arg1: i32) -> (i32, i32) {
    %c0_i32 = arith.constant 0 : i32
    return %arg0, %arg1 : i32, i32
  }
  func.func @transform_1(%arg0: i32, %arg1: i32) -> (i32, i32) {
    %c0_i32 = arith.constant 0 : i32
    return %arg0, %arg1 : i32, i32
  }
  func.func @transform_2(%arg0: i32, %arg1: i32) -> (i32, i32) {
    %c0_i32 = arith.constant 0 : i32
    %c0_i32_0 = arith.constant 0 : i32
    return %arg1, %c0_i32 : i32, i32
  }
  func.func @transform_3(%arg0: i32, %arg1: i32) -> (i32, i32) {
    %c0_i32 = arith.constant 0 : i32
    %c0_i32_0 = arith.constant 0 : i32
    %c0_i32_1 = arith.constant 0 : i32
    return %c0_i32, %c0_i32_0 : i32, i32
  }
  func.func @transform_4(%arg0: i32, %arg1: i32) -> (i32, i32) {
    %c0_i32 = arith.constant 0 : i32
    %c0_i32_0 = arith.constant 0 : i32
    %c0_i32_1 = arith.constant 0 : i32
    return %c0_i32, %c0_i32_0 : i32, i32
  }
  func.func @transform_5(%arg0: i32, %arg1: i32) -> (i32, i32) {
    %c0_i32 = arith.constant 0 : i32
    %c0_i32_0 = arith.constant 0 : i32
    %c0_i32_1 = arith.constant 0 : i32
    return %c0_i32, %c0_i32_0 : i32, i32
  }
  func.func @transform_6(%arg0: i32, %arg1: i32) -> (i32, i32) {
    %c0_i32 = arith.constant 0 : i32
    %c0_i32_0 = arith.constant 0 : i32
    return %arg0, %c0_i32 : i32, i32
  }
}

</mosaic_0001>

<llo_original>
// kernel: tpu_custom_call.1
$region0: #{tpu_custom_call.1}
  #allocation0 [shape = 'u32[]', space=smem, size = 0x4, offset = 0x4, fixed_abs, tag = 'smem constant byte address 0x4 - core index']
  #allocation1 [shape = 'u32[144,128]{1,0:T(1,128)}', space=vmem, size = 0x12000, scoped, tag = 'internal scratch']
  #allocation2 [shape = 'f32[32,128]{1,0:T(8,128)}', space=vmem, size = 0x4000, scoped, tag = 'scratch operand']
  %s0 = inlined_call_operand.hbm [shape: bf16[16,1024], index: 0, kind: input, shape index: {}]
  %s1 = inlined_call_operand.hbm [shape: bf16[16,1024], index: 1, kind: input, shape index: {}]
  %s2 = inlined_call_operand.hbm [shape: bf16[1024,128], index: 2, kind: input, shape index: {}]
  %s3 = inlined_call_operand.vmem [shape: f32[1,128], index: 3, kind: input, shape index: {}]
  %s4 = inlined_call_operand.hbm [shape: bf16[128,128], index: 4, kind: input, shape index: {}]
  %s5 = inlined_call_operand.vmem [shape: f32[1,128], index: 5, kind: input, shape index: {}]
  %s6 = inlined_call_operand.hbm [shape: f32[16,128], index: 6, kind: output, shape index: {}]
  %s7 = sld [smem:[#allocation0]]
  $region81: #{tpu_custom_call.1} parent=0
    _
  %s9 = ssub.s32 1, %s7
  %s10 = scalar_select 0, %s9, %s7
  $region1: #{tpu_custom_call.1} parent=0
    #allocation3 [shape = 'u8[32768]{0}', space=vmem, size = 0x8000, scoped, tag = 'input window, operand 0']
    #allocation4 [shape = 's32[2]{0}', space=sflag, size = 0x8, scoped, tag = 'scoped memory for tpu_custom_call.1']
    #allocation5 [shape = 's32[2]{0}', space=sflag, size = 0x8, scoped, tag = 'scoped memory for tpu_custom_call.1']
    #allocation6 [shape = 'u8[32768]{0}', space=vmem, size = 0x8000, scoped, tag = 'input window, operand 1']
    #allocation7 [shape = 's32[2]{0}', space=sflag, size = 0x8, scoped, tag = 'scoped memory for tpu_custom_call.1']
    #allocation8 [shape = 'u8[262144]{0}', space=vmem, size = 0x40000, scoped, tag = 'input window, operand 2']
    #allocation9 [shape = 'u8[32768]{0}', space=vmem, size = 0x8000, scoped, tag = 'input window, operand 4, single buffered']
    #allocation10 [shape = 's32[1]{0}', space=sflag, size = 0x4, scoped, tag = 'scoped memory for tpu_custom_call.1']
    #allocation11 [shape = 'u8[8192]{0}', space=vmem, size = 0x2000, scoped, tag = 'output window, operand 0, single buffered']
    %11 = vsyncpa [#allocation4], 0
    %s12 = scalar_lea.sflag [#allocation4], 1
    %13 = vsyncpa %s12, 0
    %14 = vsyncpa [#allocation7], 0
    %s15 = scalar_lea.sflag [#allocation7], 1
    %16 = vsyncpa %s15, 0
    %17 = vsyncpa [#allocation10], 0
    %18 = vsyncpa [#allocation5], 0
    loop: start=0, step=1, limit=4
    $region2: #{tpu_custom_call.1} parent=1 // loop_pre_header
      _
    $region3: #{tpu_custom_call.1} parent=1 // loop_header
      %s20 = sphi 0, %s24
      %p21 = scmp.ge.s32.totalorder %s20, 4
      %s27 = sphi 0, %s39
      %s28 = sphi 0, %s35
      %s29 = sphi 0, %s27
      %s30 = sphi 0, %s28
      %s31 = sphi 0, %s29
      %s32 = sphi 0, %s30
      %s44 = sphi 0, %s46
      %s47 = sphi 0, %s44
      %s48 = sphi 0, %s47
      %s64 = sphi 0, %s48
      %s72 = sphi 0, %s74
      %s75 = sphi 0, %s72
      %s76 = sphi 0, %s75
      %s92 = sphi 0, %s76
      %s98 = sphi 0, %s100
      %s101 = sphi 0, %s98
      %s102 = sphi 0, %s101
      %s118 = sphi 0, %s102
      %s122 = sphi 0, %s122
      %s124 = sphi 0, %s122
      %s125 = sphi 0, %s124
      %s139 = sphi 0, %s125
      %s143 = sphi 0, %s143
      %s145 = sphi 0, %s143
      %s146 = sphi 0, %s145
      %s160 = sphi 0, %s146
      %s164 = sphi 0, %s164
      %s166 = sphi 0, %s164
      %s167 = sphi 0, %s166
      %s181 = sphi 0, %s167
      %s187 = sphi 0, %s189
      %s190 = sphi 0, %s187
      %s191 = sphi 0, %s190
      %s207 = sphi 0, %s191
    $region4: #{tpu_custom_call.1} parent=1 // loop_header_branch
      %23 = sbr.rel (%p21) target = $region8
    $region5: #{tpu_custom_call.1} parent=1 // loop_body
      %s25 = ssub.s32 %s20, 1
      %s26 = ssub.s32 %s20, 2
      %s33 = sadd.s32 1, %s28
      %p34 = scmp.ge.s32.totalorder %s33, 2
      %s35 = scalar_select %p34, 0, %s33
      %s36 = sadd.s32 1, %s27
      %s37 = scalar_select %p34, %s36, %s27
      %p38 = scmp.ge.s32.totalorder %s37, 1
      %s39 = scalar_select %p38, 0, %s37
      %s40 = ssub.s32 %s27, %s39
      %s41 = ssub.s32 %s28, %s35
      %s42 = sor.u32 %s40, %s41
      %p43 = scmp.eq.s32.totalorder %s42, 0
      %s45 = sadd.s32 %s44, 1
      %s46 = scalar_select %p43, %s44, %s45
      %p49 = pneg %p43
      %p50 = scmp.eq.s32.totalorder %s20, 1
      %p51 = por %p49, %p50
      %p52 = scmp.ne.s32.totalorder %s44, %s47
      %p53 = scmp.eq.s32.totalorder %s20, 0
      %p54 = por %p52, %p53
      %p55 = scmp.ne.s32.totalorder %s44, %s47
      %p56 = scmp.eq.s32.totalorder %s25, 1
      %p57 = por %p55, %p56
      %p58 = scmp.ne.s32.totalorder %s47, %s48
      %p59 = scmp.eq.s32.totalorder %s25, 0
      %p60 = por %p58, %p59
      %p61 = scmp.ne.s32.totalorder %s47, %s48
      %p62 = scmp.eq.s32.totalorder %s26, 1
      %p63 = por %p61, %p62
      %p65 = scmp.ne.s32.totalorder %s48, %s64
      %p66 = scmp.eq.s32.totalorder %s26, 0
      %p67 = por %p65, %p66
      %s68 = ssub.s32 %s27, %s39
      %s69 = ssub.s32 %s28, %s35
      %s70 = sor.u32 %s68, %s69
      %p71 = scmp.eq.s32.totalorder %s70, 0
      %s73 = sadd.s32 %s72, 1
      %s74 = scalar_select %p71, %s72, %s73
      %p77 = pneg %p71
      %p78 = scmp.eq.s32.totalorder %s20, 1
      %p79 = por %p77, %p78
      %p80 = scmp.ne.s32.totalorder %s72, %s75
      %p81 = scmp.eq.s32.totalorder %s20, 0
      %p82 = por %p80, %p81
      %p83 = scmp.ne.s32.totalorder %s72, %s75
      %p84 = scmp.eq.s32.totalorder %s25, 1
      %p85 = por %p83, %p84
      %p86 = scmp.ne.s32.totalorder %s75, %s76
      %p87 = scmp.eq.s32.totalorder %s25, 0
      %p88 = por %p86, %p87
      %p89 = scmp.ne.s32.totalorder %s75, %s76
      %p90 = scmp.eq.s32.totalorder %s26, 1
      %p91 = por %p89, %p90
      %p93 = scmp.ne.s32.totalorder %s76, %s92
      %p94 = scmp.eq.s32.totalorder %s26, 0
      %p95 = por %p93, %p94
      %s96 = ssub.s32 %s28, %s35
      %p97 = scmp.eq.s32.totalorder %s96, 0
      %s99 = sadd.s32 %s98, 1
      %s100 = scalar_select %p97, %s98, %s99
      %p103 = pneg %p97
      %p104 = scmp.eq.s32.totalorder %s20, 1
      %p105 = por %p103, %p104
      %p106 = scmp.ne.s32.totalorder %s98, %s101
      %p107 = scmp.eq.s32.totalorder %s20, 0
      %p108 = por %p106, %p107
      %p109 = scmp.ne.s32.totalorder %s98, %s101
      %p110 = scmp.eq.s32.totalorder %s25, 1
      %p111 = por %p109, %p110
      %p112 = scmp.ne.s32.totalorder %s101, %s102
      %p113 = scmp.eq.s32.totalorder %s25, 0
      %p114 = por %p112, %p113
      %p115 = scmp.ne.s32.totalorder %s101, %s102
      %p116 = scmp.eq.s32.totalorder %s26, 1
      %p117 = por %p115, %p116
      %p119 = scmp.ne.s32.totalorder %s102, %s118
      %p120 = scmp.eq.s32.totalorder %s26, 0
      %p121 = por %p119, %p120
      %s123 = sadd.s32 %s122, 1
      %p126 = scmp.eq.s32.totalorder %s20, 1
      %p127 = scmp.ne.s32.totalorder %s122, %s124
      %p128 = scmp.eq.s32.totalorder %s20, 0
      %p129 = por %p127, %p128
      %p130 = scmp.ne.s32.totalorder %s122, %s124
      %p131 = scmp.eq.s32.totalorder %s25, 1
      %p132 = por %p130, %p131
      %p133 = scmp.ne.s32.totalorder %s124, %s125
      %p134 = scmp.eq.s32.totalorder %s25, 0
      %p135 = por %p133, %p134
      %p136 = scmp.ne.s32.totalorder %s124, %s125
      %p137 = scmp.eq.s32.totalorder %s26, 1
      %p138 = por %p136, %p137
      %p140 = scmp.ne.s32.totalorder %s125, %s139
      %p141 = scmp.eq.s32.totalorder %s26, 0
      %p142 = por %p140, %p141
      %s144 = sadd.s32 %s143, 1
      %p147 = scmp.eq.s32.totalorder %s20, 1
      %p148 = scmp.ne.s32.totalorder %s143, %s145
      %p149 = scmp.eq.s32.totalorder %s20, 0
      %p150 = por %p148, %p149
      %p151 = scmp.ne.s32.totalorder %s143, %s145
      %p152 = scmp.eq.s32.totalorder %s25, 1
      %p153 = por %p151, %p152
      %p154 = scmp.ne.s32.totalorder %s145, %s146
      %p155 = scmp.eq.s32.totalorder %s25, 0
      %p156 = por %p154, %p155
      %p157 = scmp.ne.s32.totalorder %s145, %s146
      %p158 = scmp.eq.s32.totalorder %s26, 1
      %p159 = por %p157, %p158
      %p161 = scmp.ne.s32.totalorder %s146, %s160
      %p162 = scmp.eq.s32.totalorder %s26, 0
      %p163 = por %p161, %p162
      %s165 = sadd.s32 %s164, 1
      %p168 = scmp.eq.s32.totalorder %s20, 1
      %p169 = scmp.ne.s32.totalorder %s164, %s166
      %p170 = scmp.eq.s32.totalorder %s20, 0
      %p171 = por %p169, %p170
      %p172 = scmp.ne.s32.totalorder %s164, %s166
      %p173 = scmp.eq.s32.totalorder %s25, 1
      %p174 = por %p172, %p173
      %p175 = scmp.ne.s32.totalorder %s166, %s167
      %p176 = scmp.eq.s32.totalorder %s25, 0
      %p177 = por %p175, %p176
      %p178 = scmp.ne.s32.totalorder %s166, %s167
      %p179 = scmp.eq.s32.totalorder %s26, 1
      %p180 = por %p178, %p179
      %p182 = scmp.ne.s32.totalorder %s167, %s181
      %p183 = scmp.eq.s32.totalorder %s26, 0
      %p184 = por %p182, %p183
      %s185 = ssub.s32 %s27, %s39
      %p186 = scmp.eq.s32.totalorder %s185, 0
      %s188 = sadd.s32 %s187, 1
      %s189 = scalar_select %p186, %s187, %s188
      %p192 = pneg %p186
      %p193 = scmp.eq.s32.totalorder %s20, 1
      %p194 = por %p192, %p193
      %p195 = scmp.ne.s32.totalorder %s187, %s190
      %p196 = scmp.eq.s32.totalorder %s20, 0
      %p197 = por %p195, %p196
      %p198 = scmp.ne.s32.totalorder %s187, %s190
      %p199 = scmp.eq.s32.totalorder %s25, 1
      %p200 = por %p198, %p199
      %p201 = scmp.ne.s32.totalorder %s190, %s191
      %p202 = scmp.eq.s32.totalorder %s25, 0
      %p203 = por %p201, %p202
      %p204 = scmp.ne.s32.totalorder %s190, %s191
      %p205 = scmp.eq.s32.totalorder %s26, 1
      %p206 = por %p204, %p205
      %p208 = scmp.ne.s32.totalorder %s191, %s207
      %p209 = scmp.eq.s32.totalorder %s26, 0
      %p210 = por %p208, %p209
      %p211 = scmp.le.s32.totalorder 1, %s20
      %p212 = scmp.lt.s32.totalorder %s20, 3
      %p213 = pnand %p211, %p212
      %p214 = pneg %p213
      // Predicated region
      $region9: #{tpu_custom_call.1} parent=5 // pred_check
        _
      $region10: #{tpu_custom_call.1} parent=5 // pred_check_branch
        %216 = sbr.rel (%p213) target = $region12
      $region11: #{tpu_custom_call.1} parent=5 // pred_region
        %s217 = ssub.s32 %s20, 1
        // Predicated region
        $region13: #{tpu_custom_call.1} parent=11 // pred_check
          %p218 = pneg %p135
        $region14: #{tpu_custom_call.1} parent=11 // pred_check_branch
          %220 = sbr.rel (%p218) target = $region16
        $region15: #{tpu_custom_call.1} parent=11 // pred_region
          _
        $region16: #{tpu_custom_call.1} parent=11 // pred_fallthru
          _
        // Predicated region
        $region17: #{tpu_custom_call.1} parent=11 // pred_check
          %p221 = pneg %p156
        $region18: #{tpu_custom_call.1} parent=11 // pred_check_branch
          %223 = sbr.rel (%p221) target = $region20
        $region19: #{tpu_custom_call.1} parent=11 // pred_region
          %s225 = ssub.s32 1024, 1024
          %226 = vsyncadd [#allocation10], %s225
          %s227 = sshll.u32 [#allocation9], 4
          %s228 = int_to_ptr.vmem [resolvable:$true] %s227
          %233 = dma.hbm_to_vmem [thread:$0]  %s4, 1024, %s228, [#allocation10], 64, 64, 4
        $region20: #{tpu_custom_call.1} parent=11 // pred_fallthru
          _
        // Predicated region
        $region21: #{tpu_custom_call.1} parent=11 // pred_check
          %p234 = pneg %p177
        $region22: #{tpu_custom_call.1} parent=11 // pred_check_branch
          %236 = sbr.rel (%p234) target = $region24
        $region23: #{tpu_custom_call.1} parent=11 // pred_region
          _
        $region24: #{tpu_custom_call.1} parent=11 // pred_fallthru
          _
      $region12: #{tpu_custom_call.1} parent=5 // pred_fallthru
        _
      %p237 = scmp.lt.s32.totalorder %s20, 2
      // Predicated region
      $region25: #{tpu_custom_call.1} parent=5 // pred_check
        %p238 = pneg %p237
      $region26: #{tpu_custom_call.1} parent=5 // pred_check_branch
        %240 = sbr.rel (%p238) target = $region28
      $region27: #{tpu_custom_call.1} parent=5 // pred_region
        // Predicated region
        $region29: #{tpu_custom_call.1} parent=27 // pred_check
          %p241 = pneg %p54
        $region30: #{tpu_custom_call.1} parent=27 // pred_check_branch
          %243 = sbr.rel (%p241) target = $region32
        $region31: #{tpu_custom_call.1} parent=27 // pred_region
          %s244 = sand.u32 %s44, 1
          %s245 = scalar_lea.sflag [#allocation4], %s244
          %s246 = sand.u32 %s44, 1
          %s247 = smul.addr %s246, 32
          %s248 = scalar_lea.vmem [#allocation3], %s247
          %s249 = smul.u32 2, %s27
          %s250 = smul.u32 4, %s28
          %s252 = ssub.s32 512, 512
          %253 = vsyncadd %s245, %s252
          %s254 = smul.addr %s249, 8
          %s255 = sadd.s32 %s250, %s254
          %s256 = smul.addr %s255, 64
          %s257 = scalar_lea.hbm %s0, %s256
          %s258 = sshll.u32 %s248, 4
          %s259 = int_to_ptr.vmem [resolvable:$true] %s258
          %264 = dma.hbm_to_vmem [thread:$0]  %s257, 512, %s259, %s245, 512, 256, 16
        $region32: #{tpu_custom_call.1} parent=27 // pred_fallthru
          _
        // Predicated region
        $region33: #{tpu_custom_call.1} parent=27 // pred_check
          %p265 = pneg %p82
        $region34: #{tpu_custom_call.1} parent=27 // pred_check_branch
          %267 = sbr.rel (%p265) target = $region36
        $region35: #{tpu_custom_call.1} parent=27 // pred_region
          %s268 = sand.u32 %s20, 1
          %s269 = scalar_lea.sflag [#allocation7], %s268
          %s270 = sand.u32 %s72, 1
          %s271 = smul.addr %s270, 32
          %s272 = scalar_lea.vmem [#allocation6], %s271
          %s273 = smul.u32 2, %s27
          %s274 = smul.u32 4, %s28
          %s276 = ssub.s32 512, 512
          %277 = vsyncadd %s269, %s276
          %s278 = smul.addr %s273, 8
          %s279 = sadd.s32 %s274, %s278
          %s280 = smul.addr %s279, 64
          %s281 = scalar_lea.hbm %s1, %s280
          %s282 = sshll.u32 %s272, 4
          %s283 = int_to_ptr.vmem [resolvable:$true] %s282
          %288 = dma.hbm_to_vmem [thread:$0]  %s281, 512, %s283, %s269, 512, 256, 16
        $region36: #{tpu_custom_call.1} parent=27 // pred_fallthru
          _
        // Predicated region
        $region37: #{tpu_custom_call.1} parent=27 // pred_check
          %p289 = pneg %p108
        $region38: #{tpu_custom_call.1} parent=27 // pred_check_branch
          %291 = sbr.rel (%p289) target = $region40
        $region39: #{tpu_custom_call.1} parent=27 // pred_region
          %s292 = sand.u32 %s20, 1
          %s293 = scalar_lea.sflag [#allocation7], %s292
          %s294 = sand.u32 %s98, 1
          %s295 = smul.addr %s294, 256
          %s296 = scalar_lea.vmem [#allocation8], %s295
          %s297 = smul.u32 64, %s28
          %s299 = ssub.s32 4096, 4096
          %300 = vsyncadd %s293, %s299
          %s301 = smul.addr %s297, 64
          %s302 = scalar_lea.hbm %s2, %s301
          %s303 = sshll.u32 %s296, 4
          %s304 = int_to_ptr.vmem [resolvable:$true] %s303
          %309 = dma.hbm_to_vmem [thread:$0]  %s302, 4096, %s304, %s293, 64, 64, 4
        $region40: #{tpu_custom_call.1} parent=27 // pred_fallthru
          _
      $region28: #{tpu_custom_call.1} parent=5 // pred_fallthru
        _
      %p310 = scmp.le.s32.totalorder 1, %s20
      %p311 = scmp.lt.s32.totalorder %s20, 3
      %p312 = pnand %p310, %p311
      %p313 = pneg %p312
      // Predicated region
      $region41: #{tpu_custom_call.1} parent=5 // pred_check
        _
      $region42: #{tpu_custom_call.1} parent=5 // pred_check_branch
        %315 = sbr.rel (%p312) target = $region44
      $region43: #{tpu_custom_call.1} parent=5 // pred_region
        %s316 = ssub.s32 %s20, 1
        %s317 = sand.u32 %s47, 1
        %s318 = scalar_lea.sflag [#allocation4], %s317
        %s319 = sand.u32 %s47, 1
        %s320 = smul.addr %s319, 32
        %s321 = scalar_lea.vmem [#allocation3], %s320
        // Predicated region
        $region45: #{tpu_custom_call.1} parent=43 // pred_check
          %p322 = pneg %p60
        $region46: #{tpu_custom_call.1} parent=43 // pred_check_branch
          %324 = sbr.rel (%p322) target = $region48
        $region47: #{tpu_custom_call.1} parent=43 // pred_region
          %325 = dma.done %s318, 512
        $region48: #{tpu_custom_call.1} parent=43 // pred_fallthru
          _
        %s326 = sand.u32 %s25, 1
        %s327 = scalar_lea.sflag [#allocation7], %s326
        %s328 = sand.u32 %s75, 1
        %s329 = smul.addr %s328, 32
        %s330 = scalar_lea.vmem [#allocation6], %s329
        // Predicated region
        $region49: #{tpu_custom_call.1} parent=43 // pred_check
          %p331 = pneg %p88
        $region50: #{tpu_custom_call.1} parent=43 // pred_check_branch
          %333 = sbr.rel (%p331) target = $region52
        $region51: #{tpu_custom_call.1} parent=43 // pred_region
          %334 = dma.done %s327, 512
        $region52: #{tpu_custom_call.1} parent=43 // pred_fallthru
          _
        %s335 = sand.u32 %s25, 1
        %s336 = scalar_lea.sflag [#allocation7], %s335
        %s337 = sand.u32 %s101, 1
        %s338 = smul.addr %s337, 256
        %s339 = scalar_lea.vmem [#allocation8], %s338
        // Predicated region
        $region53: #{tpu_custom_call.1} parent=43 // pred_check
          %p340 = pneg %p114
        $region54: #{tpu_custom_call.1} parent=43 // pred_check_branch
          %342 = sbr.rel (%p340) target = $region56
        $region55: #{tpu_custom_call.1} parent=43 // pred_region
          %343 = dma.done %s336, 4096
        $region56: #{tpu_custom_call.1} parent=43 // pred_fallthru
          _
        // Predicated region
        $region57: #{tpu_custom_call.1} parent=43 // pred_check
          %p344 = pneg %p156
        $region58: #{tpu_custom_call.1} parent=43 // pred_check_branch
          %346 = sbr.rel (%p344) target = $region60
        $region59: #{tpu_custom_call.1} parent=43 // pred_region
          %347 = dma.done [#allocation10], 1024
        $region60: #{tpu_custom_call.1} parent=43 // pred_fallthru
          _
        %s348 = sand.u32 %s47, 1
        %s349 = scalar_lea.sflag [#allocation4], %s348
        %s350 = sand.u32 %s47, 1
        %s351 = smul.addr %s350, 32
        %s352 = scalar_lea.vmem [#allocation3], %s351
        %p353 = pneg %p60
        %p354 = pneg %p57
        %s355 = sand.u32 %s25, 1
        %s356 = scalar_lea.sflag [#allocation7], %s355
        %s357 = sand.u32 %s75, 1
        %s358 = smul.addr %s357, 32
        %s359 = scalar_lea.vmem [#allocation6], %s358
        %p360 = pneg %p88
        %p361 = pneg %p85
        %s362 = sand.u32 %s25, 1
        %s363 = scalar_lea.sflag [#allocation7], %s362
        %s364 = sand.u32 %s101, 1
        %s365 = smul.addr %s364, 256
        %s366 = scalar_lea.vmem [#allocation8], %s365
        %p367 = pneg %p114
        %p368 = pneg %p111
        %p369 = pneg %p135
        %p370 = pneg %p132
        %p371 = pneg %p156
        %p372 = pneg %p153
        %p373 = pneg %p177
        %p374 = pneg %p174
        %p375 = pneg %p203
        %p376 = pneg %p200
        %s377 = smul.u32 2, %s29
        %s378 = smul.u32 4, %s30
        %s379 = smul.u32 2, %s29
        %s380 = smul.u32 4, %s30
        %s381 = smul.u32 64, %s30
        %s382 = smul.u32 2, %s29
        %p384 = scmp.eq.s32.totalorder %s30, 0
        // Predicated region
        $region61: #{tpu_custom_call.1} parent=43 // pred_check
          %p385 = pneg %p384
        $region62: #{tpu_custom_call.1} parent=43 // pred_check_branch
          %387 = sbr.rel (%p385) target = $region64
        $region63: #{tpu_custom_call.1} parent=43 // pred_region
          %388 = vst [vmem:[#allocation2] sm:$0xff] 0.0
          %389 = vst [vmem:[#allocation2 + $0x8] sm:$0xff] 0.0
          %390 = vst [vmem:[#allocation2 + $0x10] sm:$0xff] 0.0
          %391 = vst [vmem:[#allocation2 + $0x18] sm:$0xff] 0.0
        $region64: #{tpu_custom_call.1} parent=43 // pred_fallthru
          _
        %v392 = vld [vmem:[%s321] sm:$0xff]
        %v393 = vld [vmem:[%s321 + $0x8] sm:$0xff]
        %v394 = vld [vmem:[%s321 + $0x10] sm:$0xff]
        %v395 = vld [vmem:[%s321 + $0x18] sm:$0xff]
        %v396 = vld [vmem:[%s330] sm:$0xff]
        %v397 = vld [vmem:[%s330 + $0x8] sm:$0xff]
        %v398 = vld [vmem:[%s330 + $0x10] sm:$0xff]
        %v399 = vld [vmem:[%s330 + $0x18] sm:$0xff]
        %v404 = vunpack.c.l.b16 %v392
        %v405 = vunpack.c.h.b16 %v392
        %v406 = vunpack.c.l.b16 %v393
        %v407 = vunpack.c.h.b16 %v393
        %v408 = vunpack.c.l.b16 %v394
        %v409 = vunpack.c.h.b16 %v394
        %v410 = vunpack.c.l.b16 %v395
        %v411 = vunpack.c.h.b16 %v395
        %v412 = vpack.c.b16 %v408, %v404
        %v413 = vpack.c.b16 %v409, %v405
        %v414 = vpack.c.b16 %v410, %v406
        %v415 = vpack.c.b16 %v411, %v407
        %v424 = vunpack.c.l.b16 %v396
        %v425 = vunpack.c.h.b16 %v396
        %v426 = vunpack.c.l.b16 %v397
        %v427 = vunpack.c.h.b16 %v397
        %v428 = vunpack.c.l.b16 %v398
        %v429 = vunpack.c.h.b16 %v398
        %v430 = vunpack.c.l.b16 %v399
        %v431 = vunpack.c.h.b16 %v399
        %v432 = vpack.c.b16 %v428, %v424
        %v433 = vpack.c.b16 %v429, %v425
        %v434 = vpack.c.b16 %v430, %v426
        %v435 = vpack.c.b16 %v431, %v427
        %v440 = vld [vmem:[#allocation2] sm:$0xff]
        %v441 = vld [vmem:[#allocation2 + $0x8] sm:$0xff]
        %v442 = vld [vmem:[#allocation2 + $0x10] sm:$0xff]
        %v443 = vld [vmem:[#allocation2 + $0x18] sm:$0xff]
        %v444 = vld [vmem:[%s339] sm:$0xf]
        %v445 = vld [vmem:[%s339 + $0x4] sm:$0xf]
        %v446 = vld [vmem:[%s339 + $0x8] sm:$0xf]
        %v447 = vld [vmem:[%s339 + $0xc] sm:$0xf]
        %v448 = vld [vmem:[%s339 + $0x10] sm:$0xf]
        %v449 = vld [vmem:[%s339 + $0x14] sm:$0xf]
        %v450 = vld [vmem:[%s339 + $0x18] sm:$0xf]
        %v451 = vld [vmem:[%s339 + $0x1c] sm:$0xf]
        %v452 = vld [vmem:[%s339 + $0x20] sm:$0xf]
        %v453 = vld [vmem:[%s339 + $0x24] sm:$0xf]
        %v454 = vld [vmem:[%s339 + $0x28] sm:$0xf]
        %v455 = vld [vmem:[%s339 + $0x2c] sm:$0xf]
        %v456 = vld [vmem:[%s339 + $0x30] sm:$0xf]
        %v457 = vld [vmem:[%s339 + $0x34] sm:$0xf]
        %v458 = vld [vmem:[%s339 + $0x38] sm:$0xf]
        %v459 = vld [vmem:[%s339 + $0x3c] sm:$0xf]
        %v460 = vld [vmem:[%s339 + $0x40] sm:$0xf]
        %v461 = vld [vmem:[%s339 + $0x44] sm:$0xf]
        %v462 = vld [vmem:[%s339 + $0x48] sm:$0xf]
        %v463 = vld [vmem:[%s339 + $0x4c] sm:$0xf]
        %v464 = vld [vmem:[%s339 + $0x50] sm:$0xf]
        %v465 = vld [vmem:[%s339 + $0x54] sm:$0xf]
        %v466 = vld [vmem:[%s339 + $0x58] sm:$0xf]
        %v467 = vld [vmem:[%s339 + $0x5c] sm:$0xf]
        %v468 = vld [vmem:[%s339 + $0x60] sm:$0xf]
        %v469 = vld [vmem:[%s339 + $0x64] sm:$0xf]
        %v470 = vld [vmem:[%s339 + $0x68] sm:$0xf]
        %v471 = vld [vmem:[%s339 + $0x6c] sm:$0xf]
        %v472 = vld [vmem:[%s339 + $0x70] sm:$0xf]
        %v473 = vld [vmem:[%s339 + $0x74] sm:$0xf]
        %v474 = vld [vmem:[%s339 + $0x78] sm:$0xf]
        %v475 = vld [vmem:[%s339 + $0x7c] sm:$0xf]
        %v476 = vld [vmem:[%s339 + $0x80] sm:$0xf]
        %v477 = vld [vmem:[%s339 + $0x84] sm:$0xf]
        %v478 = vld [vmem:[%s339 + $0x88] sm:$0xf]
        %v479 = vld [vmem:[%s339 + $0x8c] sm:$0xf]
        %v480 = vld [vmem:[%s339 + $0x90] sm:$0xf]
        %v481 = vld [vmem:[%s339 + $0x94] sm:$0xf]
        %v482 = vld [vmem:[%s339 + $0x98] sm:$0xf]
        %v483 = vld [vmem:[%s339 + $0x9c] sm:$0xf]
        %v484 = vld [vmem:[%s339 + $0xa0] sm:$0xf]
        %v485 = vld [vmem:[%s339 + $0xa4] sm:$0xf]
        %v486 = vld [vmem:[%s339 + $0xa8] sm:$0xf]
        %v487 = vld [vmem:[%s339 + $0xac] sm:$0xf]
        %v488 = vld [vmem:[%s339 + $0xb0] sm:$0xf]
        %v489 = vld [vmem:[%s339 + $0xb4] sm:$0xf]
        %v490 = vld [vmem:[%s339 + $0xb8] sm:$0xf]
        %v491 = vld [vmem:[%s339 + $0xbc] sm:$0xf]
        %v492 = vld [vmem:[%s339 + $0xc0] sm:$0xf]
        %v493 = vld [vmem:[%s339 + $0xc4] sm:$0xf]
        %v494 = vld [vmem:[%s339 + $0xc8] sm:$0xf]
        %v495 = vld [vmem:[%s339 + $0xcc] sm:$0xf]
        %v496 = vld [vmem:[%s339 + $0xd0] sm:$0xf]
        %v497 = vld [vmem:[%s339 + $0xd4] sm:$0xf]
        %v498 = vld [vmem:[%s339 + $0xd8] sm:$0xf]
        %v499 = vld [vmem:[%s339 + $0xdc] sm:$0xf]
        %v500 = vld [vmem:[%s339 + $0xe0] sm:$0xf]
        %v501 = vld [vmem:[%s339 + $0xe4] sm:$0xf]
        %v502 = vld [vmem:[%s339 + $0xe8] sm:$0xf]
        %v503 = vld [vmem:[%s339 + $0xec] sm:$0xf]
        %v504 = vld [vmem:[%s339 + $0xf0] sm:$0xf]
        %v505 = vld [vmem:[%s339 + $0xf4] sm:$0xf]
        %v506 = vld [vmem:[%s339 + $0xf8] sm:$0xf]
        %v507 = vld [vmem:[%s339 + $0xfc] sm:$0xf]
        %v572 = vunpack.c.l.b16 %v444
        %v573 = vunpack.c.l.b16 %v445
        %v574 = vunpack.c.l.b16 %v446
        %v575 = vunpack.c.l.b16 %v447
        %v576 = vunpack.c.l.b16 %v448
        %v577 = vunpack.c.l.b16 %v449
        %v578 = vunpack.c.l.b16 %v450
        %v579 = vunpack.c.l.b16 %v451
        %v580 = vunpack.c.l.b16 %v452
        %v581 = vunpack.c.l.b16 %v453
        %v582 = vunpack.c.l.b16 %v454
        %v583 = vunpack.c.l.b16 %v455
        %v584 = vunpack.c.l.b16 %v456
        %v585 = vunpack.c.l.b16 %v457
        %v586 = vunpack.c.l.b16 %v458
        %v587 = vunpack.c.l.b16 %v459
        %v588 = vunpack.c.l.b16 %v460
        %v589 = vunpack.c.l.b16 %v461
        %v590 = vunpack.c.l.b16 %v462
        %v591 = vunpack.c.l.b16 %v463
        %v592 = vunpack.c.l.b16 %v464
        %v593 = vunpack.c.l.b16 %v465
        %v594 = vunpack.c.l.b16 %v466
        %v595 = vunpack.c.l.b16 %v467
        %v596 = vunpack.c.l.b16 %v468
        %v597 = vunpack.c.l.b16 %v469
        %v598 = vunpack.c.l.b16 %v470
        %v599 = vunpack.c.l.b16 %v471
        %v600 = vunpack.c.l.b16 %v472
        %v601 = vunpack.c.l.b16 %v473
        %v602 = vunpack.c.l.b16 %v474
        %v603 = vunpack.c.l.b16 %v475
        %v604 = vunpack.c.l.b16 %v476
        %v605 = vunpack.c.l.b16 %v477
        %v606 = vunpack.c.l.b16 %v478
        %v607 = vunpack.c.l.b16 %v479
        %v608 = vunpack.c.l.b16 %v480
        %v609 = vunpack.c.l.b16 %v481
        %v610 = vunpack.c.l.b16 %v482
        %v611 = vunpack.c.l.b16 %v483
        %v612 = vunpack.c.l.b16 %v484
        %v613 = vunpack.c.l.b16 %v485
        %v614 = vunpack.c.l.b16 %v486
        %v615 = vunpack.c.l.b16 %v487
        %v616 = vunpack.c.l.b16 %v488
        %v617 = vunpack.c.l.b16 %v489
        %v618 = vunpack.c.l.b16 %v490
        %v619 = vunpack.c.l.b16 %v491
        %v620 = vunpack.c.l.b16 %v492
        %v621 = vunpack.c.l.b16 %v493
        %v622 = vunpack.c.l.b16 %v494
        %v623 = vunpack.c.l.b16 %v495
        %v624 = vunpack.c.l.b16 %v496
        %v625 = vunpack.c.l.b16 %v497
        %v626 = vunpack.c.l.b16 %v498
        %v627 = vunpack.c.l.b16 %v499
        %v628 = vunpack.c.l.b16 %v500
        %v629 = vunpack.c.l.b16 %v501
        %v630 = vunpack.c.l.b16 %v502
        %v631 = vunpack.c.l.b16 %v503
        %v632 = vunpack.c.l.b16 %v504
        %v633 = vunpack.c.l.b16 %v505
        %v634 = vunpack.c.l.b16 %v506
        %v635 = vunpack.c.l.b16 %v507
        %v636 = vpack.c.b16 %v573, %v572
        %v637 = vpack.c.b16 %v575, %v574
        %v638 = vpack.c.b16 %v577, %v576
        %v639 = vpack.c.b16 %v579, %v578
        %v640 = vpack.c.b16 %v581, %v580
        %v641 = vpack.c.b16 %v583, %v582
        %v642 = vpack.c.b16 %v585, %v584
        %v643 = vpack.c.b16 %v587, %v586
        %v644 = vpack.c.b16 %v589, %v588
        %v645 = vpack.c.b16 %v591, %v590
        %v646 = vpack.c.b16 %v593, %v592
        %v647 = vpack.c.b16 %v595, %v594
        %v648 = vpack.c.b16 %v597, %v596
        %v649 = vpack.c.b16 %v599, %v598
        %v650 = vpack.c.b16 %v601, %v600
        %v651 = vpack.c.b16 %v603, %v602
        %v652 = vpack.c.b16 %v605, %v604
        %v653 = vpack.c.b16 %v607, %v606
        %v654 = vpack.c.b16 %v609, %v608
        %v655 = vpack.c.b16 %v611, %v610
        %v656 = vpack.c.b16 %v613, %v612
        %v657 = vpack.c.b16 %v615, %v614
        %v658 = vpack.c.b16 %v617, %v616
        %v659 = vpack.c.b16 %v619, %v618
        %v660 = vpack.c.b16 %v621, %v620
        %v661 = vpack.c.b16 %v623, %v622
        %v662 = vpack.c.b16 %v625, %v624
        %v663 = vpack.c.b16 %v627, %v626
        %v664 = vpack.c.b16 %v629, %v628
        %v665 = vpack.c.b16 %v631, %v630
        %v666 = vpack.c.b16 %v633, %v632
        %v667 = vpack.c.b16 %v635, %v634
        %700 = vmatprep.subr.bf16.mxu0 0
        %701 = vmatpush1.bf16.msra.mxu0 %v643
        %702 = vmatprep.subr.bf16.mxu0 0
        %703 = vmatpush1.bf16.msra.mxu0 %v642
        %704 = vmatprep.subr.bf16.mxu0 0
        %705 = vmatpush1.bf16.msra.mxu0 %v641
        %706 = vmatprep.subr.bf16.mxu0 0
        %707 = vmatpush1.bf16.msra.mxu0 %v640
        %708 = vmatprep.subr.bf16.mxu0 0
        %709 = vmatpush1.bf16.msra.mxu0 %v639
        %710 = vmatprep.subr.bf16.mxu0 0
        %711 = vmatpush1.bf16.msra.mxu0 %v638
        %712 = vmatprep.subr.bf16.mxu0 0
        %713 = vmatpush1.bf16.msra.mxu0 %v637
        %714 = vmatprep.subr.bf16.mxu0 0
        %715 = vmatpush1.bf16.msra.mxu0 %v636
        %716 = vmatprep.subr.bf16.mxu0 0
        %717 = vmatpush2.bf16.msra.mxu0 %v651
        %718 = vmatprep.subr.bf16.mxu0 0
        %719 = vmatpush2.bf16.msra.mxu0 %v650
        %720 = vmatprep.subr.bf16.mxu0 0
        %721 = vmatpush2.bf16.msra.mxu0 %v649
        %722 = vmatprep.subr.bf16.mxu0 0
        %723 = vmatpush2.bf16.msra.mxu0 %v648
        %724 = vmatprep.subr.bf16.mxu0 0
        %725 = vmatpush2.bf16.msra.mxu0 %v647
        %726 = vmatprep.subr.bf16.mxu0 0
        %727 = vmatpush2.bf16.msra.mxu0 %v646
        %728 = vmatprep.subr.bf16.mxu0 0
        %729 = vmatpush2.bf16.msra.mxu0 %v645
        %730 = vmatprep.subr.bf16.mxu0 0
        %731 = vmatpush2.bf16.msra.mxu0 %v644
        %732 = vmatprep.mubr.bf16.mxu0 %v413
        %733 = vmatmul.mubr.bf16.gmra.mxu0 %v412
        %v734 = vpop.f32.mrf.mxu0
        %v735 = vadd.f32 0.0, %v734
        %v736 = vpop.f32.mrf.mxu0
        %v737 = vpop.f32.mrf.mxu0
        %v738 = vadd.f32 0.0, %v737
        %v739 = vpop.f32.mrf.mxu0
        %740 = vmatprep.mubr.bf16.mxu0 %v433
        %741 = vmatmul.mubr.bf16.gmra.mxu0 %v432
        %v742 = vpop.f32.mrf.mxu0
        %v743 = vadd.f32 0.0, %v742
        %v744 = vpop.f32.mrf.mxu0
        %v745 = vpop.f32.mrf.mxu0
        %v746 = vadd.f32 0.0, %v745
        %v747 = vpop.f32.mrf.mxu0
        %748 = vdwg.mxu0
        %749 = vmatprep.subr.bf16.mxu0 0
        %750 = vmatpush1.bf16.msra.mxu0 %v659
        %751 = vmatprep.subr.bf16.mxu0 0
        %752 = vmatpush1.bf16.msra.mxu0 %v658
        %753 = vmatprep.subr.bf16.mxu0 0
        %754 = vmatpush1.bf16.msra.mxu0 %v657
        %755 = vmatprep.subr.bf16.mxu0 0
        %756 = vmatpush1.bf16.msra.mxu0 %v656
        %757 = vmatprep.subr.bf16.mxu0 0
        %758 = vmatpush1.bf16.msra.mxu0 %v655
        %759 = vmatprep.subr.bf16.mxu0 0
        %760 = vmatpush1.bf16.msra.mxu0 %v654
        %761 = vmatprep.subr.bf16.mxu0 0
        %762 = vmatpush1.bf16.msra.mxu0 %v653
        %763 = vmatprep.subr.bf16.mxu0 0
        %764 = vmatpush1.bf16.msra.mxu0 %v652
        %765 = vmatprep.subr.bf16.mxu0 0
        %766 = vmatpush2.bf16.msra.mxu0 %v667
        %767 = vmatprep.subr.bf16.mxu0 0
        %768 = vmatpush2.bf16.msra.mxu0 %v666
        %769 = vmatprep.subr.bf16.mxu0 0
        %770 = vmatpush2.bf16.msra.mxu0 %v665
        %771 = vmatprep.subr.bf16.mxu0 0
        %772 = vmatpush2.bf16.msra.mxu0 %v664
        %773 = vmatprep.subr.bf16.mxu0 0
        %774 = vmatpush2.bf16.msra.mxu0 %v663
        %775 = vmatprep.subr.bf16.mxu0 0
        %776 = vmatpush2.bf16.msra.mxu0 %v662
        %777 = vmatprep.subr.bf16.mxu0 0
        %778 = vmatpush2.bf16.msra.mxu0 %v661
        %779 = vmatprep.subr.bf16.mxu0 0
        %780 = vmatpush2.bf16.msra.mxu0 %v660
        %781 = vmatprep.mubr.bf16.mxu0 %v415
        %782 = vmatmul.mubr.bf16.gmra.mxu0 %v414
        %v783 = vpop.f32.mrf.mxu0
        %v784 = vadd.f32 %v735, %v783
        %v785 = vpop.f32.mrf.mxu0
        %v786 = vpop.f32.mrf.mxu0
        %v787 = vadd.f32 %v738, %v786
        %v788 = vpop.f32.mrf.mxu0
        %789 = vmatprep.mubr.bf16.mxu0 %v435
        %790 = vmatmul.mubr.bf16.gmra.mxu0 %v434
        %v791 = vpop.f32.mrf.mxu0
        %v792 = vadd.f32 %v743, %v791
        %v793 = vpop.f32.mrf.mxu0
        %v794 = vpop.f32.mrf.mxu0
        %v795 = vadd.f32 %v746, %v794
        %v796 = vpop.f32.mrf.mxu0
        %797 = vdwg.mxu0
        %v798 = vadd.f32 %v440, %v784
        %v799 = vadd.f32 %v441, %v787
        %v800 = vadd.f32 %v442, %v792
        %v801 = vadd.f32 %v443, %v795
        %802 = vst [vmem:[#allocation2] sm:$0xff] %v798
        %803 = vst [vmem:[#allocation2 + $0x8] sm:$0xff] %v799
        %804 = vst [vmem:[#allocation2 + $0x10] sm:$0xff] %v800
        %805 = vst [vmem:[#allocation2 + $0x18] sm:$0xff] %v801
        %p806 = scmp.eq.s32.totalorder %s30, 1
        // Predicated region
        $region65: #{tpu_custom_call.1} parent=43 // pred_check
          %p807 = pneg %p806
        $region66: #{tpu_custom_call.1} parent=43 // pred_check_branch
          %809 = sbr.rel (%p807) target = $region68
        $region67: #{tpu_custom_call.1} parent=43 // pred_region
          %v810 = vld [vmem:[#allocation2] sm:$0xff]
          %v811 = vld [vmem:[#allocation2 + $0x8] sm:$0xff]
          %v812 = vld [vmem:[#allocation2 + $0x10] sm:$0xff]
          %v813 = vld [vmem:[#allocation2 + $0x18] sm:$0xff]
          %v814 = vld [vmem:[%s3] sm:$0x1]
          %v816 = vlaneseq
          %v817 = vshrl.u32 %v816, 7
          %v818 = vsub.s32 0, %v817
          %v819 = vrot.slane %v814, %v818
          %v821 = vadd.f32 %v810, %v819
          %v822 = vadd.f32 %v811, %v819
          %v823 = vadd.f32 %v812, %v819
          %v824 = vadd.f32 %v813, %v819
          %v825 = vmax.f32 %v821, 0.0
          %v826 = vmax.f32 %v822, 0.0
          %v827 = vmax.f32 %v823, 0.0
          %v828 = vmax.f32 %v824, 0.0
          %v829 = vpack.c.bf16 %v826, %v825
          %v830 = vpack.c.bf16 %v828, %v827
          %v831 = vld [vmem:[#allocation9] sm:$0xf]
          %v832 = vld [vmem:[#allocation9 + $0x4] sm:$0xf]
          %v833 = vld [vmem:[#allocation9 + $0x8] sm:$0xf]
          %v834 = vld [vmem:[#allocation9 + $0xc] sm:$0xf]
          %v835 = vld [vmem:[#allocation9 + $0x10] sm:$0xf]
          %v836 = vld [vmem:[#allocation9 + $0x14] sm:$0xf]
          %v837 = vld [vmem:[#allocation9 + $0x18] sm:$0xf]
          %v838 = vld [vmem:[#allocation9 + $0x1c] sm:$0xf]
          %v839 = vld [vmem:[#allocation9 + $0x20] sm:$0xf]
          %v840 = vld [vmem:[#allocation9 + $0x24] sm:$0xf]
          %v841 = vld [vmem:[#allocation9 + $0x28] sm:$0xf]
          %v842 = vld [vmem:[#allocation9 + $0x2c] sm:$0xf]
          %v843 = vld [vmem:[#allocation9 + $0x30] sm:$0xf]
          %v844 = vld [vmem:[#allocation9 + $0x34] sm:$0xf]
          %v845 = vld [vmem:[#allocation9 + $0x38] sm:$0xf]
          %v846 = vld [vmem:[#allocation9 + $0x3c] sm:$0xf]
          %v847 = vld [vmem:[%s5] sm:$0x1]
          %v849 = vlaneseq
          %v850 = vshrl.u32 %v849, 7
          %v851 = vsub.s32 0, %v850
          %v852 = vrot.slane %v847, %v851
          %v870 = vunpack.c.l.b16 %v831
          %v871 = vunpack.c.l.b16 %v832
          %v872 = vunpack.c.l.b16 %v833
          %v873 = vunpack.c.l.b16 %v834
          %v874 = vunpack.c.l.b16 %v835
          %v875 = vunpack.c.l.b16 %v836
          %v876 = vunpack.c.l.b16 %v837
          %v877 = vunpack.c.l.b16 %v838
          %v878 = vunpack.c.l.b16 %v839
          %v879 = vunpack.c.l.b16 %v840
          %v880 = vunpack.c.l.b16 %v841
          %v881 = vunpack.c.l.b16 %v842
          %v882 = vunpack.c.l.b16 %v843
          %v883 = vunpack.c.l.b16 %v844
          %v884 = vunpack.c.l.b16 %v845
          %v885 = vunpack.c.l.b16 %v846
          %v886 = vpack.c.b16 %v871, %v870
          %v887 = vpack.c.b16 %v873, %v872
          %v888 = vpack.c.b16 %v875, %v874
          %v889 = vpack.c.b16 %v877, %v876
          %v890 = vpack.c.b16 %v879, %v878
          %v891 = vpack.c.b16 %v881, %v880
          %v892 = vpack.c.b16 %v883, %v882
          %v893 = vpack.c.b16 %v885, %v884
          %902 = vmatprep.subr.bf16.mxu0 0
          %903 = vmatpush1.bf16.msra.mxu0 %v893
          %904 = vmatprep.subr.bf16.mxu0 0
          %905 = vmatpush1.bf16.msra.mxu0 %v892
          %906 = vmatprep.subr.bf16.mxu0 0
          %907 = vmatpush1.bf16.msra.mxu0 %v891
          %908 = vmatprep.subr.bf16.mxu0 0
          %909 = vmatpush1.bf16.msra.mxu0 %v890
          %910 = vmatprep.subr.bf16.mxu0 0
          %911 = vmatpush1.bf16.msra.mxu0 %v889
          %912 = vmatprep.subr.bf16.mxu0 0
          %913 = vmatpush1.bf16.msra.mxu0 %v888
          %914 = vmatprep.subr.bf16.mxu0 0
          %915 = vmatpush1.bf16.msra.mxu0 %v887
          %916 = vmatprep.subr.bf16.mxu0 0
          %917 = vmatpush1.bf16.msra.mxu0 %v886
          %918 = vmatprep.subr.bf16.mxu0 0
          %919 = vmatpush2.bf16.msra.mxu0 0
          %920 = vmatprep.subr.bf16.mxu0 0
          %921 = vmatpush2.bf16.msra.mxu0 0
          %922 = vmatprep.subr.bf16.mxu0 0
          %923 = vmatpush2.bf16.msra.mxu0 0
          %924 = vmatprep.subr.bf16.mxu0 0
          %925 = vmatpush2.bf16.msra.mxu0 0
          %926 = vmatprep.subr.bf16.mxu0 0
          %927 = vmatpush2.bf16.msra.mxu0 0
          %928 = vmatprep.subr.bf16.mxu0 0
          %929 = vmatpush2.bf16.msra.mxu0 0
          %930 = vmatprep.subr.bf16.mxu0 0
          %931 = vmatpush2.bf16.msra.mxu0 0
          %932 = vmatprep.subr.bf16.mxu0 0
          %933 = vmatpush2.bf16.msra.mxu0 0
          %934 = vmatprep.mubr.bf16.mxu0 0
          %935 = vmatmul.mubr.bf16.gmra.mxu0 %v829
          %v936 = vpop.f32.mrf.mxu0
          %v937 = vadd.f32 %v852, %v936
          %v938 = vpop.f32.mrf.mxu0
          %v939 = vpop.f32.mrf.mxu0
          %v940 = vadd.f32 %v852, %v939
          %v941 = vpop.f32.mrf.mxu0
          %942 = vmatprep.mubr.bf16.mxu0 0
          %943 = vmatmul.mubr.bf16.gmra.mxu0 %v830
          %v944 = vpop.f32.mrf.mxu0
          %v945 = vadd.f32 %v852, %v944
          %v946 = vpop.f32.mrf.mxu0
          %v947 = vpop.f32.mrf.mxu0
          %v948 = vadd.f32 %v852, %v947
          %v949 = vpop.f32.mrf.mxu0
          %950 = vdwg.mxu0
          %v951 = vmul.f32 %v937, %v945
          %v952 = vmul.f32 %v940, %v948
          %953 = vadd.xlane.f32.xlu0 %v951
          %v954 = vpop.xlane.xlu0 %953
          %955 = vadd.xlane.f32.xlu0 %v952
          %v956 = vpop.xlane.xlu0 %955
          %v957 = vmul.f32 %v937, %v937
          %v958 = vmul.f32 %v940, %v940
          %959 = vadd.xlane.f32.xlu0 %v957
          %v960 = vpop.xlane.xlu0 %959
          %961 = vadd.xlane.f32.xlu0 %v958
          %v962 = vpop.xlane.xlu0 %961
          %v963 = vmul.f32 %v945, %v945
          %v964 = vmul.f32 %v948, %v948
          %965 = vadd.xlane.f32.xlu0 %v963
          %v966 = vpop.xlane.xlu0 %965
          %967 = vadd.xlane.f32.xlu0 %v964
          %v968 = vpop.xlane.xlu0 %967
          %v969 = vmax.f32 %v960, 1e-16
          %v970 = vmax.f32 %v962, 1e-16
          %v971 = vmax.f32 %v966, 1e-16
          %v972 = vmax.f32 %v968, 1e-16
          %v973 = vmul.f32 %v969, %v971
          %v974 = vmul.f32 %v970, %v972
          %v975 = vrsqrt.pop %v973
          %v976 = vrsqrt.pop %v974
          %v977 = vmul.f32 %v954, %v975
          %v978 = vmul.f32 %v956, %v976
          %v979 = vadd.f32 %v977, 1.0
          %v980 = vadd.f32 %v978, 1.0
          %v981 = vmul.f32 %v979, 0.5
          %v982 = vmul.f32 %v980, 0.5
          %983 = vst [vmem:[#allocation11] sm:$0xff] %v981
          %984 = vst [vmem:[#allocation11 + $0x8] sm:$0xff] %v982
        $region68: #{tpu_custom_call.1} parent=43 // pred_fallthru
          _
        // Predicated region
        $region69: #{tpu_custom_call.1} parent=43 // pred_check
          %p985 = pneg %p200
        $region70: #{tpu_custom_call.1} parent=43 // pred_check_branch
          %987 = sbr.rel (%p985) target = $region72
        $region71: #{tpu_custom_call.1} parent=43 // pred_region
          %s988 = smul.u32 2, %s29
          %s990 = ssub.s32 256, 256
          %991 = vsyncadd [#allocation5], %s990
          %s992 = smul.addr %s988, 128
          %s993 = scalar_lea.hbm %s6, %s992
          %s994 = sshll.u32 [#allocation11], 4
          %s995 = int_to_ptr.vmem [resolvable:$true] %s994
          %1000 = dma.vmem_to_hbm [thread:$0]  %s995, 256, %s993, [#allocation5], 128, 128, 8
        $region72: #{tpu_custom_call.1} parent=43 // pred_fallthru
          _
        // Predicated region
        $region73: #{tpu_custom_call.1} parent=43 // pred_check
          %p1001 = pneg %p200
        $region74: #{tpu_custom_call.1} parent=43 // pred_check_branch
          %1003 = sbr.rel (%p1001) target = $region76
        $region75: #{tpu_custom_call.1} parent=43 // pred_region
          %1004 = dma.done [#allocation5], 256
        $region76: #{tpu_custom_call.1} parent=43 // pred_fallthru
          _
      $region44: #{tpu_custom_call.1} parent=5 // pred_fallthru
        _
      %p1005 = scmp.le.s32.totalorder 2, %s20
      // Predicated region
      $region77: #{tpu_custom_call.1} parent=5 // pred_check
        %p1006 = pneg %p1005
      $region78: #{tpu_custom_call.1} parent=5 // pred_check_branch
        %1008 = sbr.rel (%p1006) target = $region80
      $region79: #{tpu_custom_call.1} parent=5 // pred_region
        %s1009 = ssub.s32 %s20, 2
      $region80: #{tpu_custom_call.1} parent=5 // pred_fallthru
        _
    $region6: #{tpu_custom_call.1} parent=1 // loop_footer
      %s24 = sadd.s32 1, %s20
    $region7: #{tpu_custom_call.1} parent=1 // loop_footer_branch
      %19 = sbr.rel target = $region3
    $region8: #{tpu_custom_call.1} parent=1 // loop_exit
      _
    %1010 = vsyncpa [#allocation4], 1
    %s1011 = scalar_lea.sflag [#allocation4], 1
    %1012 = vsyncpa %s1011, 1
    %1013 = vsyncpa [#allocation7], 1
    %s1014 = scalar_lea.sflag [#allocation7], 1
    %1015 = vsyncpa %s1014, 1
    %1016 = vsyncpa [#allocation10], 1
    %1017 = vsyncpa [#allocation5], 1
    %s1018 = scalar_lea.sflag [#allocation5], 1
    %1019 = vsyncpa %s1018, 1

</llo_original>
